<compile_context>
chip_gen: v7x
topology: tpu7x:2x2x1
jax: 0.10.0
libtpu: 0.0.40
codegen_flags: <defaults>
</compile_context>

<pallas_src>
import math
from functools import partial

import jax
import jax.numpy as jnp
from jax import lax
from jax.experimental import pallas as pl
from jax.experimental.pallas import tpu as pltpu

_PAD_ROWS = 8        # padded batch (sublane) extent
_PAD_COLS = 128      # padded feature (lane) extent
_LOSS_COL = 8        # output-slab lane carrying the per-row loss2 partial
_N_LAYERS = 6
_FEAT = 15           # true input feature width


# --------------------------------------------------------------------------
# Kernel
# --------------------------------------------------------------------------
def _mlp_kernel(x_ref, w_ref, b_ref, out_ref, *, batch):
    """Fused encoder+decoder pass on (8,128)-padded operands."""
    x = x_ref[...]                           # (8, 128), valid region [batch, 15]
    b = b_ref[...]                           # (8, 128), rows 0..5 = biases

    def dense(a, i):
        # a: (8,128), w_ref[i]: (128,128) zero-padded -> padded lanes stay 0.
        return jnp.dot(a, w_ref[i], preferred_element_type=jnp.float32) + b[i:i + 1, :]

    # encoder: 15 -> 20 -> 20 -> 6  (tanh, tanh, linear)
    h = jnp.tanh(dense(x, 0))
    h = jnp.tanh(dense(h, 1))
    enc = dense(h, 2)

    # decoder: 6 -> 20 -> 20 -> 15  (relu, relu, linear); one iteration of the
    # reference's 100x loop (all iterations are identical).
    d = jnp.maximum(dense(enc, 3), 0.0)
    d = jnp.maximum(dense(d, 4), 0.0)
    l2 = dense(d, 5)

    # ||l2 - x||^2 over the valid (batch, 15) region only; lane-only reduction.
    diff = l2 - x
    row_ids = lax.broadcasted_iota(jnp.int32, (_PAD_ROWS, _PAD_COLS), 0)
    col_ids = lax.broadcasted_iota(jnp.int32, (_PAD_ROWS, _PAD_COLS), 1)
    valid = (row_ids < batch) & (col_ids < _FEAT)
    sq = jnp.where(valid, diff * diff, 0.0)
    loss2_part = jnp.sum(sq, axis=1, keepdims=True)       # (8, 1)

    # Single lane-dense store: encoder values everywhere (valid cols 0..5; the
    # padded cols are exactly zero), with the loss2 partial spliced into
    # column _LOSS_COL.
    out_ref[...] = jnp.where(col_ids == _LOSS_COL, loss2_part, enc)


def _run_kernel(x_pad, w_slab, b_slab, batch):
    vmem = pl.BlockSpec(memory_space=pltpu.MemorySpace.VMEM)
    return pl.pallas_call(
        partial(_mlp_kernel, batch=batch),
        out_shape=jax.ShapeDtypeStruct((_PAD_ROWS, _PAD_COLS), jnp.float32),
        in_specs=[vmem, vmem, vmem],
        out_specs=vmem,
    )(x_pad, w_slab, b_slab)


# --------------------------------------------------------------------------
# Parameter construction / packing
# --------------------------------------------------------------------------
_LAYER_DIMS = [(15, 20), (20, 20), (20, 6),    # encoder1_1, encoder1_2, encoder1_3
               (6, 20), (20, 20), (20, 15)]    # linear_x_1, linear_x_2, linear_x_3


def init_params(key):
    """nn.Linear-style init: U(-1/sqrt(fan_in), 1/sqrt(fan_in)); W is (in, out)."""
    params = []
    for din, dout in _LAYER_DIMS:
        key, kw, kb = jax.random.split(key, 3)
        bound = 1.0 / math.sqrt(din)
        w = jax.random.uniform(kw, (din, dout), jnp.float32, -bound, bound)
        b = jax.random.uniform(kb, (1, dout), jnp.float32, -bound, bound)
        params.extend([w, b])
    return tuple(params)


def pack_params(params):
    """Pack 12 small tensors into one (6,128,128) weight slab + one (8,128) bias slab."""
    w_blocks, b_rows = [], []
    for i in range(_N_LAYERS):
        w, b = params[2 * i], params[2 * i + 1]
        din, dout = w.shape
        w_blocks.append(jnp.zeros((_PAD_COLS, _PAD_COLS), jnp.float32).at[:din, :dout].set(w))
        b_rows.append(jnp.zeros((_PAD_COLS,), jnp.float32).at[:dout].set(b[0]))
    w_slab = jnp.stack(w_blocks)                                       # (6, 128, 128)
    b_slab = jnp.zeros((_PAD_ROWS, _PAD_COLS), jnp.float32).at[:_N_LAYERS].set(
        jnp.stack(b_rows))                                             # (8, 128)
    return w_slab, b_slab


# --------------------------------------------------------------------------
# Fully-jitted forward (kernel + scalar post-processing)
# --------------------------------------------------------------------------
@jax.jit
def linear_net_hamiltonian_forward(x, u0, packed_params):
    del u0  # accepted for signature parity; unused by the reference forward.
    w_slab, b_slab = packed_params
    B, F = x.shape
    assert B <= _PAD_ROWS and F == _FEAT, "this kernel assumes batch <= 8, 15 features"

    x_pad = jnp.zeros((_PAD_ROWS, _PAD_COLS), jnp.float32).at[:B, :F].set(x)
    out = _run_kernel(x_pad, w_slab, b_slab, B)

    e = out[0, :6]                                   # encoder[0, :]
    loss2 = jnp.sum(out[:, _LOSS_COL])               # finish the tiny sublane sum
    loss2_sum = 100.0 * loss2                        # 100 identical loop iterations
    loss = loss2_sum / 100.0

    loss_re = jnp.abs(e[0] ** 2 + e[1] ** 2 + e[2] ** 2 - 1.0)
    ge_z1 = [e[0]]
    ge_z2 = [e[1]]
    ge_x = [e[2]]
    junzhi = [e[3], e[4], e[5], loss_re, loss_re * e[3] * e[4] * e[5]]

    return loss, ge_z1, ge_x, ge_z2, loss2_sum / 50.0, junzhi


# --------------------------------------------------------------------------
# Pure-JAX reference (for a correctness sanity check only)
# --------------------------------------------------------------------------
def _reference(x, params):
    def lin(a, w, b):
        return jnp.dot(a, w, precision=lax.Precision.HIGHEST) + b

    w1, b1, w2, b2, w3, b3, wd1, bd1, wd2, bd2, wd3, bd3 = params
    h = jnp.tanh(lin(x, w1, b1))
    h = jnp.tanh(lin(h, w2, b2))
    enc = lin(h, w3, b3)
    d = jnp.maximum(lin(enc, wd1, bd1), 0.0)
    d = jnp.maximum(lin(d, wd2, bd2), 0.0)
    l2 = lin(d, wd3, bd3)
    loss2 = jnp.sum((l2 - x) ** 2)
    return enc, loss2


if __name__ == "__main__":
    key = jax.random.PRNGKey(0)
    kx, kp = jax.random.split(key, 2)

    # small shapes implied by the module: features = 15, batch = 2
    x = jax.random.normal(kx, (2, _FEAT), dtype=jnp.float32)
    u0 = jnp.array([1], dtype=jnp.int32)            # unused by forward (as in reference)
    raw_params = init_params(kp)
    packed = pack_params(raw_params)                # packed once, reused per call

    out = linear_net_hamiltonian_forward(x, u0, packed)
    jax.block_until_ready(out)

    # lightweight correctness check against a pure-JAX reference
    enc_ref, loss2_ref = _reference(x, raw_params)
    loss, ge_z1, ge_x, ge_z2, loss2_over_50, junzhi = out
    ok_loss = bool(jnp.allclose(loss, loss2_ref, rtol=2e-2, atol=2e-2))
    ok_enc = bool(jnp.allclose(jnp.stack([ge_z1[0], ge_z2[0], ge_x[0]]),
                               enc_ref[0, :3], rtol=2e-2, atol=2e-2))
    if not (ok_loss and ok_enc):
        raise SystemExit("kernel output mismatch vs reference")

    print("KERNEL_OK")
</pallas_src>

<mosaic_0001>
module attributes {stable_mosaic.version = 11 : i64} {
  func.func @_mlp_kernel(%arg0: memref<8x128xf32, #tpu.memory_space<vmem>>, %arg1: memref<6x128x128xf32, #tpu.memory_space<vmem>>, %arg2: memref<8x128xf32, #tpu.memory_space<vmem>>, %arg3: memref<8x128xf32, #tpu.memory_space<vmem>>) attributes {dimension_semantics = [], scalar_prefetch = 0 : i64, scratch_operands = 0 : i64, tpu.core_type = #tpu.core_type<tc>} {
    %c0 = arith.constant 0 : index
    %c0_0 = arith.constant 0 : index
    %0 = vector.load %arg0[%c0, %c0_0] : memref<8x128xf32, #tpu.memory_space<vmem>>, vector<8x128xf32>
    %c0_1 = arith.constant 0 : index
    %c0_2 = arith.constant 0 : index
    %1 = vector.load %arg2[%c0_1, %c0_2] : memref<8x128xf32, #tpu.memory_space<vmem>>, vector<8x128xf32>
    %c0_3 = arith.constant 0 : index
    %c0_4 = arith.constant 0 : index
    %c0_5 = arith.constant 0 : index
    %2 = vector.load %arg1[%c0_3, %c0_4, %c0_5] : memref<6x128x128xf32, #tpu.memory_space<vmem>>, vector<1x128x128xf32>
    %3 = vector.shape_cast %2 : vector<1x128x128xf32> to vector<128x128xf32>
    %cst = arith.constant dense<0.000000e+00> : vector<8x128xf32>
    %4 = tpu.matmul %0, %3, %cst {dimension_numbers = #tpu.dot_dimension_numbers<[1], [0], [0], [1], [0, 0, 1, 1], [], []>} : vector<8x128xf32>, vector<128x128xf32>, vector<8x128xf32> -> vector<8x128xf32>
    %5 = vector.extract_strided_slice %1 {offsets = [0, 0], sizes = [1, 128], strides = [1, 1]} : vector<8x128xf32> to vector<1x128xf32>
    %6 = vector.broadcast %5 : vector<1x128xf32> to vector<8x128xf32>
    %7 = arith.addf %4, %6 : vector<8x128xf32>
    %8 = math.tanh %7 : vector<8x128xf32>
    %c1 = arith.constant 1 : index
    %c0_6 = arith.constant 0 : index
    %c0_7 = arith.constant 0 : index
    %9 = vector.load %arg1[%c1, %c0_6, %c0_7] : memref<6x128x128xf32, #tpu.memory_space<vmem>>, vector<1x128x128xf32>
    %10 = vector.shape_cast %9 : vector<1x128x128xf32> to vector<128x128xf32>
    %cst_8 = arith.constant dense<0.000000e+00> : vector<8x128xf32>
    %11 = tpu.matmul %8, %10, %cst_8 {dimension_numbers = #tpu.dot_dimension_numbers<[1], [0], [0], [1], [0, 0, 1, 1], [], []>} : vector<8x128xf32>, vector<128x128xf32>, vector<8x128xf32> -> vector<8x128xf32>
    %12 = vector.extract_strided_slice %1 {offsets = [1, 0], sizes = [1, 128], strides = [1, 1]} : vector<8x128xf32> to vector<1x128xf32>
    %13 = vector.broadcast %12 : vector<1x128xf32> to vector<8x128xf32>
    %14 = arith.addf %11, %13 : vector<8x128xf32>
    %15 = math.tanh %14 : vector<8x128xf32>
    %c2 = arith.constant 2 : index
    %c0_9 = arith.constant 0 : index
    %c0_10 = arith.constant 0 : index
    %16 = vector.load %arg1[%c2, %c0_9, %c0_10] : memref<6x128x128xf32, #tpu.memory_space<vmem>>, vector<1x128x128xf32>
    %17 = vector.shape_cast %16 : vector<1x128x128xf32> to vector<128x128xf32>
    %cst_11 = arith.constant dense<0.000000e+00> : vector<8x128xf32>
    %18 = tpu.matmul %15, %17, %cst_11 {dimension_numbers = #tpu.dot_dimension_numbers<[1], [0], [0], [1], [0, 0, 1, 1], [], []>} : vector<8x128xf32>, vector<128x128xf32>, vector<8x128xf32> -> vector<8x128xf32>
    %19 = vector.extract_strided_slice %1 {offsets = [2, 0], sizes = [1, 128], strides = [1, 1]} : vector<8x128xf32> to vector<1x128xf32>
    %20 = vector.broadcast %19 : vector<1x128xf32> to vector<8x128xf32>
    %21 = arith.addf %18, %20 : vector<8x128xf32>
    %c3 = arith.constant 3 : index
    %c0_12 = arith.constant 0 : index
    %c0_13 = arith.constant 0 : index
    %22 = vector.load %arg1[%c3, %c0_12, %c0_13] : memref<6x128x128xf32, #tpu.memory_space<vmem>>, vector<1x128x128xf32>
    %23 = vector.shape_cast %22 : vector<1x128x128xf32> to vector<128x128xf32>
    %cst_14 = arith.constant dense<0.000000e+00> : vector<8x128xf32>
    %24 = tpu.matmul %21, %23, %cst_14 {dimension_numbers = #tpu.dot_dimension_numbers<[1], [0], [0], [1], [0, 0, 1, 1], [], []>} : vector<8x128xf32>, vector<128x128xf32>, vector<8x128xf32> -> vector<8x128xf32>
    %25 = vector.extract_strided_slice %1 {offsets = [3, 0], sizes = [1, 128], strides = [1, 1]} : vector<8x128xf32> to vector<1x128xf32>
    %26 = vector.broadcast %25 : vector<1x128xf32> to vector<8x128xf32>
    %27 = arith.addf %24, %26 : vector<8x128xf32>
    %cst_15 = arith.constant 0.000000e+00 : f32
    %28 = vector.broadcast %cst_15 : f32 to vector<8x128xf32>
    %29 = arith.maximumf %27, %28 : vector<8x128xf32>
    %c4 = arith.constant 4 : index
    %c0_16 = arith.constant 0 : index
    %c0_17 = arith.constant 0 : index
    %30 = vector.load %arg1[%c4, %c0_16, %c0_17] : memref<6x128x128xf32, #tpu.memory_space<vmem>>, vector<1x128x128xf32>
    %31 = vector.shape_cast %30 : vector<1x128x128xf32> to vector<128x128xf32>
    %cst_18 = arith.constant dense<0.000000e+00> : vector<8x128xf32>
    %32 = tpu.matmul %29, %31, %cst_18 {dimension_numbers = #tpu.dot_dimension_numbers<[1], [0], [0], [1], [0, 0, 1, 1], [], []>} : vector<8x128xf32>, vector<128x128xf32>, vector<8x128xf32> -> vector<8x128xf32>
    %33 = vector.extract_strided_slice %1 {offsets = [4, 0], sizes = [1, 128], strides = [1, 1]} : vector<8x128xf32> to vector<1x128xf32>
    %34 = vector.broadcast %33 : vector<1x128xf32> to vector<8x128xf32>
    %35 = arith.addf %32, %34 : vector<8x128xf32>
    %cst_19 = arith.constant 0.000000e+00 : f32
    %36 = vector.broadcast %cst_19 : f32 to vector<8x128xf32>
    %37 = arith.maximumf %35, %36 : vector<8x128xf32>
    %c5 = arith.constant 5 : index
    %c0_20 = arith.constant 0 : index
    %c0_21 = arith.constant 0 : index
    %38 = vector.load %arg1[%c5, %c0_20, %c0_21] : memref<6x128x128xf32, #tpu.memory_space<vmem>>, vector<1x128x128xf32>
    %39 = vector.shape_cast %38 : vector<1x128x128xf32> to vector<128x128xf32>
    %cst_22 = arith.constant dense<0.000000e+00> : vector<8x128xf32>
    %40 = tpu.matmul %37, %39, %cst_22 {dimension_numbers = #tpu.dot_dimension_numbers<[1], [0], [0], [1], [0, 0, 1, 1], [], []>} : vector<8x128xf32>, vector<128x128xf32>, vector<8x128xf32> -> vector<8x128xf32>
    %41 = vector.extract_strided_slice %1 {offsets = [5, 0], sizes = [1, 128], strides = [1, 1]} : vector<8x128xf32> to vector<1x128xf32>
    %42 = vector.broadcast %41 : vector<1x128xf32> to vector<8x128xf32>
    %43 = arith.addf %40, %42 : vector<8x128xf32>
    %44 = arith.subf %43, %0 : vector<8x128xf32>
    %45 = tpu.iota {dimensions = array<i32: 0>} : vector<8x128xi32>
    %46 = tpu.iota {dimensions = array<i32: 1>} : vector<8x128xi32>
    %c2_i32 = arith.constant 2 : i32
    %47 = vector.broadcast %c2_i32 : i32 to vector<8x128xi32>
    %48 = arith.cmpi slt, %45, %47 : vector<8x128xi32>
    %c15_i32 = arith.constant 15 : i32
    %49 = vector.broadcast %c15_i32 : i32 to vector<8x128xi32>
    %50 = arith.cmpi slt, %46, %49 : vector<8x128xi32>
    %51 = arith.andi %48, %50 : vector<8x128xi1>
    %52 = arith.mulf %44, %44 : vector<8x128xf32>
    %cst_23 = arith.constant 0.000000e+00 : f32
    %53 = vector.broadcast %cst_23 : f32 to vector<8x128xf32>
    %54 = arith.select %51, %52, %53 : vector<8x128xi1>, vector<8x128xf32>
    %cst_24 = arith.constant dense<0.000000e+00> : vector<8xf32>
    %55 = vector.multi_reduction <add>, %54, %cst_24 [1] : vector<8x128xf32> to vector<8xf32>
    %56 = vector.shape_cast %55 : vector<8xf32> to vector<8x1xf32>
    %c8_i32 = arith.constant 8 : i32
    %57 = vector.broadcast %c8_i32 : i32 to vector<8x128xi32>
    %58 = arith.cmpi eq, %46, %57 : vector<8x128xi32>
    %59 = vector.shape_cast %56 : vector<8x1xf32> to vector<8x1xf32>
    %60 = vector.broadcast %59 : vector<8x1xf32> to vector<8x128xf32>
    %61 = arith.select %58, %60, %21 : vector<8x128xi1>, vector<8x128xf32>
    %c0_25 = arith.constant 0 : index
    %c0_26 = arith.constant 0 : index
    %62 = vector.load %arg3[%c0_25, %c0_26] : memref<8x128xf32, #tpu.memory_space<vmem>>, vector<8x128xf32>
    tpu.vector_store %arg3[%c0_25, %c0_26], %61 {strides = array<i32>} : memref<8x128xf32, #tpu.memory_space<vmem>>, vector<8x128xf32>,
    return
  }
}

</mosaic_0001>

<llo_original>
// kernel: linear_net_hamiltonian_forward.1
$region0: #{linear_net_hamiltonian_forward.1}
  #allocation0 [shape = 'u32[]', space=smem, size = 0x4, offset = 0x4, fixed_abs, tag = 'smem constant byte address 0x4 - core index']
  #allocation1 [shape = 'u32[144,128]{1,0:T(1,128)}', space=vmem, size = 0x12000, scoped, tag = 'internal scratch']
  %s0 = inlined_call_operand.vmem [shape: f32[8,128], index: 0, kind: input, shape index: {}]
  %s1 = inlined_call_operand.hbm [shape: f32[6,128,128], index: 1, kind: input, shape index: {}]
  %s2 = inlined_call_operand.vmem [shape: f32[8,128], index: 2, kind: input, shape index: {}]
  %s3 = inlined_call_operand.vmem [shape: f32[8,128], index: 3, kind: output, shape index: {}]
  %s4 = sld [smem:[#allocation0]]
  $region26: #{linear_net_hamiltonian_forward.1} parent=0
    _
  %s6 = ssub.s32 1, %s4
  %s7 = scalar_select 0, %s6, %s4
  $region1: #{linear_net_hamiltonian_forward.1} parent=0
    #allocation2 [shape = 'u8[393216]{0}', space=vmem, size = 0x60000, scoped, tag = 'input window, operand 1, single buffered']
    #allocation3 [shape = 's32[1]{0}', space=sflag, size = 0x4, scoped, tag = 'scoped memory for linear_net_hamiltonian_forward.1']
    %8 = vsyncpa [#allocation3], 0
    // Predicated region
    $region2: #{linear_net_hamiltonian_forward.1} parent=1 // pred_check
      _
    $region3: #{linear_net_hamiltonian_forward.1} parent=1 // pred_check_branch
      %10 = sbr.rel (0) target = $region5
    $region4: #{linear_net_hamiltonian_forward.1} parent=1 // pred_region
      _
    $region5: #{linear_net_hamiltonian_forward.1} parent=1 // pred_fallthru
      _
    // Predicated region
    $region6: #{linear_net_hamiltonian_forward.1} parent=1 // pred_check
      _
    $region7: #{linear_net_hamiltonian_forward.1} parent=1 // pred_check_branch
      %12 = sbr.rel (0) target = $region9
    $region8: #{linear_net_hamiltonian_forward.1} parent=1 // pred_region
      %s14 = ssub.s32 12288, 12288
      %15 = vsyncadd [#allocation3], %s14
      %s16 = sshll.u32 [#allocation2], 4
      %s17 = int_to_ptr.vmem [resolvable:$true] %s16
      %22 = dma.hbm_to_vmem [thread:$0]  %s1, 12288, %s17, [#allocation3], 128, 128, 8
    $region9: #{linear_net_hamiltonian_forward.1} parent=1 // pred_fallthru
      _
    // Predicated region
    $region10: #{linear_net_hamiltonian_forward.1} parent=1 // pred_check
      _
    $region11: #{linear_net_hamiltonian_forward.1} parent=1 // pred_check_branch
      %24 = sbr.rel (0) target = $region13
    $region12: #{linear_net_hamiltonian_forward.1} parent=1 // pred_region
      _
    $region13: #{linear_net_hamiltonian_forward.1} parent=1 // pred_fallthru
      _
    // Predicated region
    $region14: #{linear_net_hamiltonian_forward.1} parent=1 // pred_check
      _
    $region15: #{linear_net_hamiltonian_forward.1} parent=1 // pred_check_branch
      %26 = sbr.rel (0) target = $region17
    $region16: #{linear_net_hamiltonian_forward.1} parent=1 // pred_region
      %27 = dma.done [#allocation3], 12288
    $region17: #{linear_net_hamiltonian_forward.1} parent=1 // pred_fallthru
      _
    %v28 = vld [vmem:[%s0] sm:$0xff]
    %v29 = vld [vmem:[%s2] sm:$0xff]
    %v30 = vld [vmem:[#allocation2] sm:$0xff]
    %v31 = vld [vmem:[#allocation2 + $0x8] sm:$0xff]
    %v32 = vld [vmem:[#allocation2 + $0x10] sm:$0xff]
    %v33 = vld [vmem:[#allocation2 + $0x18] sm:$0xff]
    %v34 = vld [vmem:[#allocation2 + $0x20] sm:$0xff]
    %v35 = vld [vmem:[#allocation2 + $0x28] sm:$0xff]
    %v36 = vld [vmem:[#allocation2 + $0x30] sm:$0xff]
    %v37 = vld [vmem:[#allocation2 + $0x38] sm:$0xff]
    %v38 = vld [vmem:[#allocation2 + $0x40] sm:$0xff]
    %v39 = vld [vmem:[#allocation2 + $0x48] sm:$0xff]
    %v40 = vld [vmem:[#allocation2 + $0x50] sm:$0xff]
    %v41 = vld [vmem:[#allocation2 + $0x58] sm:$0xff]
    %v42 = vld [vmem:[#allocation2 + $0x60] sm:$0xff]
    %v43 = vld [vmem:[#allocation2 + $0x68] sm:$0xff]
    %v44 = vld [vmem:[#allocation2 + $0x70] sm:$0xff]
    %v45 = vld [vmem:[#allocation2 + $0x78] sm:$0xff]
    %v46 = vlaneseq
    %v47 = vshrl.u32 %v46, 7
    %v48 = vsub.s32 0, %v47
    %v49 = vrot.slane %v29, %v48
    %50 = vmatprep.subr.mxu0 0.0
    %51 = vmatpush1.msra.mxu0 %v30
    %52 = vmatprep.subr.mxu0 0.0
    %53 = vmatpush1.msra.mxu0 %v31
    %54 = vmatprep.subr.mxu0 0.0
    %55 = vmatpush1.msra.mxu0 %v32
    %56 = vmatprep.subr.mxu0 0.0
    %57 = vmatpush1.msra.mxu0 %v33
    %58 = vmatprep.subr.mxu0 0.0
    %59 = vmatpush1.msra.mxu0 %v34
    %60 = vmatprep.subr.mxu0 0.0
    %61 = vmatpush1.msra.mxu0 %v35
    %62 = vmatprep.subr.mxu0 0.0
    %63 = vmatpush1.msra.mxu0 %v36
    %64 = vmatprep.subr.mxu0 0.0
    %65 = vmatpush1.msra.mxu0 %v37
    %66 = vmatprep.subr.mxu0 0.0
    %67 = vmatpush1.msra.mxu0 %v38
    %68 = vmatprep.subr.mxu0 0.0
    %69 = vmatpush1.msra.mxu0 %v39
    %70 = vmatprep.subr.mxu0 0.0
    %71 = vmatpush1.msra.mxu0 %v40
    %72 = vmatprep.subr.mxu0 0.0
    %73 = vmatpush1.msra.mxu0 %v41
    %74 = vmatprep.subr.mxu0 0.0
    %75 = vmatpush1.msra.mxu0 %v42
    %76 = vmatprep.subr.mxu0 0.0
    %77 = vmatpush1.msra.mxu0 %v43
    %78 = vmatprep.subr.mxu0 0.0
    %79 = vmatpush1.msra.mxu0 %v44
    %80 = vmatprep.subr.mxu0 0.0
    %81 = vmatpush1.msra.mxu0 %v45
    %82 = vmatprep.subr.mxu0 0.0
    %83 = vmatpush1.msra.mxu0 0.0
    %84 = vmatprep.subr.mxu0 0.0
    %85 = vmatpush1.msra.mxu0 0.0
    %86 = vmatprep.subr.mxu0 0.0
    %87 = vmatpush1.msra.mxu0 0.0
    %88 = vmatprep.subr.mxu0 0.0
    %89 = vmatpush1.msra.mxu0 0.0
    %90 = vmatprep.subr.mxu0 0.0
    %91 = vmatpush1.msra.mxu0 0.0
    %92 = vmatprep.subr.mxu0 0.0
    %93 = vmatpush1.msra.mxu0 0.0
    %94 = vmatprep.subr.mxu0 0.0
    %95 = vmatpush1.msra.mxu0 0.0
    %96 = vmatprep.subr.mxu0 0.0
    %97 = vmatpush1.msra.mxu0 0.0
    %98 = vmatprep.subr.mxu0 0.0
    %99 = vmatpush1.msra.mxu0 0.0
    %100 = vmatprep.subr.mxu0 0.0
    %101 = vmatpush1.msra.mxu0 0.0
    %102 = vmatprep.subr.mxu0 0.0
    %103 = vmatpush1.msra.mxu0 0.0
    %104 = vmatprep.subr.mxu0 0.0
    %105 = vmatpush1.msra.mxu0 0.0
    %106 = vmatprep.subr.mxu0 0.0
    %107 = vmatpush1.msra.mxu0 0.0
    %108 = vmatprep.subr.mxu0 0.0
    %109 = vmatpush1.msra.mxu0 0.0
    %110 = vmatprep.subr.mxu0 0.0
    %111 = vmatpush1.msra.mxu0 0.0
    %112 = vmatprep.subr.mxu0 0.0
    %113 = vmatpush1.msra.mxu0 0.0
    %114 = vmatprep.mubr.f32.mxu0 0.0
    %115 = vmatmul.mubr.f32.gmra.mrb[0].mxu0 %v28
    %v116 = vpop.f32.mrb[0].mxu0
    %v117 = vadd.f32 %v49, %v116
    %v118 = vpop.f32.mrb[0].mxu0
    %119 = vdwg.mxu0
    %v120 = vtanh.pop %v117
    %s121 = scalar_lea.vmem [#allocation2], 128
    %v122 = vld [vmem:[%s121] sm:$0xff]
    %v123 = vld [vmem:[%s121 + $0x8] sm:$0xff]
    %v124 = vld [vmem:[%s121 + $0x10] sm:$0xff]
    %v125 = vld [vmem:[%s121 + $0x18] sm:$0xff]
    %v126 = vld [vmem:[%s121 + $0x20] sm:$0xff]
    %v127 = vld [vmem:[%s121 + $0x28] sm:$0xff]
    %v128 = vld [vmem:[%s121 + $0x30] sm:$0xff]
    %v129 = vld [vmem:[%s121 + $0x38] sm:$0xff]
    %v130 = vld [vmem:[%s121 + $0x40] sm:$0xff]
    %v131 = vld [vmem:[%s121 + $0x48] sm:$0xff]
    %v132 = vld [vmem:[%s121 + $0x50] sm:$0xff]
    %v133 = vld [vmem:[%s121 + $0x58] sm:$0xff]
    %v134 = vld [vmem:[%s121 + $0x60] sm:$0xff]
    %v135 = vld [vmem:[%s121 + $0x68] sm:$0xff]
    %v136 = vld [vmem:[%s121 + $0x70] sm:$0xff]
    %v137 = vld [vmem:[%s121 + $0x78] sm:$0xff]
    %v138 = vlaneseq
    %v139 = vshrl.u32 %v138, 7
    %v140 = vsub.s32 1, %v139
    %v141 = vrot.slane %v29, %v140
    %142 = vmatprep.subr.mxu0 0.0
    %143 = vmatpush1.msra.mxu0 %v122
    %144 = vmatprep.subr.mxu0 0.0
    %145 = vmatpush1.msra.mxu0 %v123
    %146 = vmatprep.subr.mxu0 0.0
    %147 = vmatpush1.msra.mxu0 %v124
    %148 = vmatprep.subr.mxu0 0.0
    %149 = vmatpush1.msra.mxu0 %v125
    %150 = vmatprep.subr.mxu0 0.0
    %151 = vmatpush1.msra.mxu0 %v126
    %152 = vmatprep.subr.mxu0 0.0
    %153 = vmatpush1.msra.mxu0 %v127
    %154 = vmatprep.subr.mxu0 0.0
    %155 = vmatpush1.msra.mxu0 %v128
    %156 = vmatprep.subr.mxu0 0.0
    %157 = vmatpush1.msra.mxu0 %v129
    %158 = vmatprep.subr.mxu0 0.0
    %159 = vmatpush1.msra.mxu0 %v130
    %160 = vmatprep.subr.mxu0 0.0
    %161 = vmatpush1.msra.mxu0 %v131
    %162 = vmatprep.subr.mxu0 0.0
    %163 = vmatpush1.msra.mxu0 %v132
    %164 = vmatprep.subr.mxu0 0.0
    %165 = vmatpush1.msra.mxu0 %v133
    %166 = vmatprep.subr.mxu0 0.0
    %167 = vmatpush1.msra.mxu0 %v134
    %168 = vmatprep.subr.mxu0 0.0
    %169 = vmatpush1.msra.mxu0 %v135
    %170 = vmatprep.subr.mxu0 0.0
    %171 = vmatpush1.msra.mxu0 %v136
    %172 = vmatprep.subr.mxu0 0.0
    %173 = vmatpush1.msra.mxu0 %v137
    %174 = vmatprep.subr.mxu0 0.0
    %175 = vmatpush1.msra.mxu0 0.0
    %176 = vmatprep.subr.mxu0 0.0
    %177 = vmatpush1.msra.mxu0 0.0
    %178 = vmatprep.subr.mxu0 0.0
    %179 = vmatpush1.msra.mxu0 0.0
    %180 = vmatprep.subr.mxu0 0.0
    %181 = vmatpush1.msra.mxu0 0.0
    %182 = vmatprep.subr.mxu0 0.0
    %183 = vmatpush1.msra.mxu0 0.0
    %184 = vmatprep.subr.mxu0 0.0
    %185 = vmatpush1.msra.mxu0 0.0
    %186 = vmatprep.subr.mxu0 0.0
    %187 = vmatpush1.msra.mxu0 0.0
    %188 = vmatprep.subr.mxu0 0.0
    %189 = vmatpush1.msra.mxu0 0.0
    %190 = vmatprep.subr.mxu0 0.0
    %191 = vmatpush1.msra.mxu0 0.0
    %192 = vmatprep.subr.mxu0 0.0
    %193 = vmatpush1.msra.mxu0 0.0
    %194 = vmatprep.subr.mxu0 0.0
    %195 = vmatpush1.msra.mxu0 0.0
    %196 = vmatprep.subr.mxu0 0.0
    %197 = vmatpush1.msra.mxu0 0.0
    %198 = vmatprep.subr.mxu0 0.0
    %199 = vmatpush1.msra.mxu0 0.0
    %200 = vmatprep.subr.mxu0 0.0
    %201 = vmatpush1.msra.mxu0 0.0
    %202 = vmatprep.subr.mxu0 0.0
    %203 = vmatpush1.msra.mxu0 0.0
    %204 = vmatprep.subr.mxu0 0.0
    %205 = vmatpush1.msra.mxu0 0.0
    %206 = vmatprep.mubr.f32.mxu0 0.0
    %207 = vmatmul.mubr.f32.gmra.mrb[0].mxu0 %v120
    %v208 = vpop.f32.mrb[0].mxu0
    %v209 = vadd.f32 %v141, %v208
    %v210 = vpop.f32.mrb[0].mxu0
    %211 = vdwg.mxu0
    %v212 = vtanh.pop %v209
    %s213 = scalar_lea.vmem [#allocation2], 256
    %v214 = vld [vmem:[%s213] sm:$0xff]
    %v215 = vld [vmem:[%s213 + $0x8] sm:$0xff]
    %v216 = vld [vmem:[%s213 + $0x10] sm:$0xff]
    %v217 = vld [vmem:[%s213 + $0x18] sm:$0xff]
    %v218 = vld [vmem:[%s213 + $0x20] sm:$0xff]
    %v219 = vld [vmem:[%s213 + $0x28] sm:$0xff]
    %v220 = vld [vmem:[%s213 + $0x30] sm:$0xff]
    %v221 = vld [vmem:[%s213 + $0x38] sm:$0xff]
    %v222 = vld [vmem:[%s213 + $0x40] sm:$0xff]
    %v223 = vld [vmem:[%s213 + $0x48] sm:$0xff]
    %v224 = vld [vmem:[%s213 + $0x50] sm:$0xff]
    %v225 = vld [vmem:[%s213 + $0x58] sm:$0xff]
    %v226 = vld [vmem:[%s213 + $0x60] sm:$0xff]
    %v227 = vld [vmem:[%s213 + $0x68] sm:$0xff]
    %v228 = vld [vmem:[%s213 + $0x70] sm:$0xff]
    %v229 = vld [vmem:[%s213 + $0x78] sm:$0xff]
    %v230 = vlaneseq
    %v231 = vshrl.u32 %v230, 7
    %v232 = vsub.s32 2, %v231
    %v233 = vrot.slane %v29, %v232
    %234 = vmatprep.subr.mxu0 0.0
    %235 = vmatpush1.msra.mxu0 %v214
    %236 = vmatprep.subr.mxu0 0.0
    %237 = vmatpush1.msra.mxu0 %v215
    %238 = vmatprep.subr.mxu0 0.0
    %239 = vmatpush1.msra.mxu0 %v216
    %240 = vmatprep.subr.mxu0 0.0
    %241 = vmatpush1.msra.mxu0 %v217
    %242 = vmatprep.subr.mxu0 0.0
    %243 = vmatpush1.msra.mxu0 %v218
    %244 = vmatprep.subr.mxu0 0.0
    %245 = vmatpush1.msra.mxu0 %v219
    %246 = vmatprep.subr.mxu0 0.0
    %247 = vmatpush1.msra.mxu0 %v220
    %248 = vmatprep.subr.mxu0 0.0
    %249 = vmatpush1.msra.mxu0 %v221
    %250 = vmatprep.subr.mxu0 0.0
    %251 = vmatpush1.msra.mxu0 %v222
    %252 = vmatprep.subr.mxu0 0.0
    %253 = vmatpush1.msra.mxu0 %v223
    %254 = vmatprep.subr.mxu0 0.0
    %255 = vmatpush1.msra.mxu0 %v224
    %256 = vmatprep.subr.mxu0 0.0
    %257 = vmatpush1.msra.mxu0 %v225
    %258 = vmatprep.subr.mxu0 0.0
    %259 = vmatpush1.msra.mxu0 %v226
    %260 = vmatprep.subr.mxu0 0.0
    %261 = vmatpush1.msra.mxu0 %v227
    %262 = vmatprep.subr.mxu0 0.0
    %263 = vmatpush1.msra.mxu0 %v228
    %264 = vmatprep.subr.mxu0 0.0
    %265 = vmatpush1.msra.mxu0 %v229
    %266 = vmatprep.subr.mxu0 0.0
    %267 = vmatpush1.msra.mxu0 0.0
    %268 = vmatprep.subr.mxu0 0.0
    %269 = vmatpush1.msra.mxu0 0.0
    %270 = vmatprep.subr.mxu0 0.0
    %271 = vmatpush1.msra.mxu0 0.0
    %272 = vmatprep.subr.mxu0 0.0
    %273 = vmatpush1.msra.mxu0 0.0
    %274 = vmatprep.subr.mxu0 0.0
    %275 = vmatpush1.msra.mxu0 0.0
    %276 = vmatprep.subr.mxu0 0.0
    %277 = vmatpush1.msra.mxu0 0.0
    %278 = vmatprep.subr.mxu0 0.0
    %279 = vmatpush1.msra.mxu0 0.0
    %280 = vmatprep.subr.mxu0 0.0
    %281 = vmatpush1.msra.mxu0 0.0
    %282 = vmatprep.subr.mxu0 0.0
    %283 = vmatpush1.msra.mxu0 0.0
    %284 = vmatprep.subr.mxu0 0.0
    %285 = vmatpush1.msra.mxu0 0.0
    %286 = vmatprep.subr.mxu0 0.0
    %287 = vmatpush1.msra.mxu0 0.0
    %288 = vmatprep.subr.mxu0 0.0
    %289 = vmatpush1.msra.mxu0 0.0
    %290 = vmatprep.subr.mxu0 0.0
    %291 = vmatpush1.msra.mxu0 0.0
    %292 = vmatprep.subr.mxu0 0.0
    %293 = vmatpush1.msra.mxu0 0.0
    %294 = vmatprep.subr.mxu0 0.0
    %295 = vmatpush1.msra.mxu0 0.0
    %296 = vmatprep.subr.mxu0 0.0
    %297 = vmatpush1.msra.mxu0 0.0
    %298 = vmatprep.mubr.f32.mxu0 0.0
    %299 = vmatmul.mubr.f32.gmra.mrb[0].mxu0 %v212
    %v300 = vpop.f32.mrb[0].mxu0
    %v301 = vadd.f32 %v233, %v300
    %v302 = vpop.f32.mrb[0].mxu0
    %303 = vdwg.mxu0
    %s304 = scalar_lea.vmem [#allocation2], 384
    %v305 = vld [vmem:[%s304] sm:$0xff]
    %v306 = vld [vmem:[%s304 + $0x8] sm:$0xff]
    %v307 = vld [vmem:[%s304 + $0x10] sm:$0xff]
    %v308 = vld [vmem:[%s304 + $0x18] sm:$0xff]
    %v309 = vld [vmem:[%s304 + $0x20] sm:$0xff]
    %v310 = vld [vmem:[%s304 + $0x28] sm:$0xff]
    %v311 = vld [vmem:[%s304 + $0x30] sm:$0xff]
    %v312 = vld [vmem:[%s304 + $0x38] sm:$0xff]
    %v313 = vld [vmem:[%s304 + $0x40] sm:$0xff]
    %v314 = vld [vmem:[%s304 + $0x48] sm:$0xff]
    %v315 = vld [vmem:[%s304 + $0x50] sm:$0xff]
    %v316 = vld [vmem:[%s304 + $0x58] sm:$0xff]
    %v317 = vld [vmem:[%s304 + $0x60] sm:$0xff]
    %v318 = vld [vmem:[%s304 + $0x68] sm:$0xff]
    %v319 = vld [vmem:[%s304 + $0x70] sm:$0xff]
    %v320 = vld [vmem:[%s304 + $0x78] sm:$0xff]
    %v321 = vlaneseq
    %v322 = vshrl.u32 %v321, 7
    %v323 = vsub.s32 3, %v322
    %v324 = vrot.slane %v29, %v323
    %325 = vmatprep.subr.mxu0 0.0
    %326 = vmatpush1.msra.mxu0 %v305
    %327 = vmatprep.subr.mxu0 0.0
    %328 = vmatpush1.msra.mxu0 %v306
    %329 = vmatprep.subr.mxu0 0.0
    %330 = vmatpush1.msra.mxu0 %v307
    %331 = vmatprep.subr.mxu0 0.0
    %332 = vmatpush1.msra.mxu0 %v308
    %333 = vmatprep.subr.mxu0 0.0
    %334 = vmatpush1.msra.mxu0 %v309
    %335 = vmatprep.subr.mxu0 0.0
    %336 = vmatpush1.msra.mxu0 %v310
    %337 = vmatprep.subr.mxu0 0.0
    %338 = vmatpush1.msra.mxu0 %v311
    %339 = vmatprep.subr.mxu0 0.0
    %340 = vmatpush1.msra.mxu0 %v312
    %341 = vmatprep.subr.mxu0 0.0
    %342 = vmatpush1.msra.mxu0 %v313
    %343 = vmatprep.subr.mxu0 0.0
    %344 = vmatpush1.msra.mxu0 %v314
    %345 = vmatprep.subr.mxu0 0.0
    %346 = vmatpush1.msra.mxu0 %v315
    %347 = vmatprep.subr.mxu0 0.0
    %348 = vmatpush1.msra.mxu0 %v316
    %349 = vmatprep.subr.mxu0 0.0
    %350 = vmatpush1.msra.mxu0 %v317
    %351 = vmatprep.subr.mxu0 0.0
    %352 = vmatpush1.msra.mxu0 %v318
    %353 = vmatprep.subr.mxu0 0.0
    %354 = vmatpush1.msra.mxu0 %v319
    %355 = vmatprep.subr.mxu0 0.0
    %356 = vmatpush1.msra.mxu0 %v320
    %357 = vmatprep.subr.mxu0 0.0
    %358 = vmatpush1.msra.mxu0 0.0
    %359 = vmatprep.subr.mxu0 0.0
    %360 = vmatpush1.msra.mxu0 0.0
    %361 = vmatprep.subr.mxu0 0.0
    %362 = vmatpush1.msra.mxu0 0.0
    %363 = vmatprep.subr.mxu0 0.0
    %364 = vmatpush1.msra.mxu0 0.0
    %365 = vmatprep.subr.mxu0 0.0
    %366 = vmatpush1.msra.mxu0 0.0
    %367 = vmatprep.subr.mxu0 0.0
    %368 = vmatpush1.msra.mxu0 0.0
    %369 = vmatprep.subr.mxu0 0.0
    %370 = vmatpush1.msra.mxu0 0.0
    %371 = vmatprep.subr.mxu0 0.0
    %372 = vmatpush1.msra.mxu0 0.0
    %373 = vmatprep.subr.mxu0 0.0
    %374 = vmatpush1.msra.mxu0 0.0
    %375 = vmatprep.subr.mxu0 0.0
    %376 = vmatpush1.msra.mxu0 0.0
    %377 = vmatprep.subr.mxu0 0.0
    %378 = vmatpush1.msra.mxu0 0.0
    %379 = vmatprep.subr.mxu0 0.0
    %380 = vmatpush1.msra.mxu0 0.0
    %381 = vmatprep.subr.mxu0 0.0
    %382 = vmatpush1.msra.mxu0 0.0
    %383 = vmatprep.subr.mxu0 0.0
    %384 = vmatpush1.msra.mxu0 0.0
    %385 = vmatprep.subr.mxu0 0.0
    %386 = vmatpush1.msra.mxu0 0.0
    %387 = vmatprep.subr.mxu0 0.0
    %388 = vmatpush1.msra.mxu0 0.0
    %389 = vmatprep.mubr.f32.mxu0 0.0
    %390 = vmatmul.mubr.f32.gmra.mrb[0].mxu0 %v301
    %v391 = vpop.f32.mrb[0].mxu0
    %v392 = vadd.f32 %v324, %v391
    %v393 = vpop.f32.mrb[0].mxu0
    %394 = vdwg.mxu0
    %v395 = vmax.f32 %v392, 0.0
    %s396 = scalar_lea.vmem [#allocation2], 512
    %v397 = vld [vmem:[%s396] sm:$0xff]
    %v398 = vld [vmem:[%s396 + $0x8] sm:$0xff]
    %v399 = vld [vmem:[%s396 + $0x10] sm:$0xff]
    %v400 = vld [vmem:[%s396 + $0x18] sm:$0xff]
    %v401 = vld [vmem:[%s396 + $0x20] sm:$0xff]
    %v402 = vld [vmem:[%s396 + $0x28] sm:$0xff]
    %v403 = vld [vmem:[%s396 + $0x30] sm:$0xff]
    %v404 = vld [vmem:[%s396 + $0x38] sm:$0xff]
    %v405 = vld [vmem:[%s396 + $0x40] sm:$0xff]
    %v406 = vld [vmem:[%s396 + $0x48] sm:$0xff]
    %v407 = vld [vmem:[%s396 + $0x50] sm:$0xff]
    %v408 = vld [vmem:[%s396 + $0x58] sm:$0xff]
    %v409 = vld [vmem:[%s396 + $0x60] sm:$0xff]
    %v410 = vld [vmem:[%s396 + $0x68] sm:$0xff]
    %v411 = vld [vmem:[%s396 + $0x70] sm:$0xff]
    %v412 = vld [vmem:[%s396 + $0x78] sm:$0xff]
    %v413 = vlaneseq
    %v414 = vshrl.u32 %v413, 7
    %v415 = vsub.s32 4, %v414
    %v416 = vrot.slane %v29, %v415
    %417 = vmatprep.subr.mxu0 0.0
    %418 = vmatpush1.msra.mxu0 %v397
    %419 = vmatprep.subr.mxu0 0.0
    %420 = vmatpush1.msra.mxu0 %v398
    %421 = vmatprep.subr.mxu0 0.0
    %422 = vmatpush1.msra.mxu0 %v399
    %423 = vmatprep.subr.mxu0 0.0
    %424 = vmatpush1.msra.mxu0 %v400
    %425 = vmatprep.subr.mxu0 0.0
    %426 = vmatpush1.msra.mxu0 %v401
    %427 = vmatprep.subr.mxu0 0.0
    %428 = vmatpush1.msra.mxu0 %v402
    %429 = vmatprep.subr.mxu0 0.0
    %430 = vmatpush1.msra.mxu0 %v403
    %431 = vmatprep.subr.mxu0 0.0
    %432 = vmatpush1.msra.mxu0 %v404
    %433 = vmatprep.subr.mxu0 0.0
    %434 = vmatpush1.msra.mxu0 %v405
    %435 = vmatprep.subr.mxu0 0.0
    %436 = vmatpush1.msra.mxu0 %v406
    %437 = vmatprep.subr.mxu0 0.0
    %438 = vmatpush1.msra.mxu0 %v407
    %439 = vmatprep.subr.mxu0 0.0
    %440 = vmatpush1.msra.mxu0 %v408
    %441 = vmatprep.subr.mxu0 0.0
    %442 = vmatpush1.msra.mxu0 %v409
    %443 = vmatprep.subr.mxu0 0.0
    %444 = vmatpush1.msra.mxu0 %v410
    %445 = vmatprep.subr.mxu0 0.0
    %446 = vmatpush1.msra.mxu0 %v411
    %447 = vmatprep.subr.mxu0 0.0
    %448 = vmatpush1.msra.mxu0 %v412
    %449 = vmatprep.subr.mxu0 0.0
    %450 = vmatpush1.msra.mxu0 0.0
    %451 = vmatprep.subr.mxu0 0.0
    %452 = vmatpush1.msra.mxu0 0.0
    %453 = vmatprep.subr.mxu0 0.0
    %454 = vmatpush1.msra.mxu0 0.0
    %455 = vmatprep.subr.mxu0 0.0
    %456 = vmatpush1.msra.mxu0 0.0
    %457 = vmatprep.subr.mxu0 0.0
    %458 = vmatpush1.msra.mxu0 0.0
    %459 = vmatprep.subr.mxu0 0.0
    %460 = vmatpush1.msra.mxu0 0.0
    %461 = vmatprep.subr.mxu0 0.0
    %462 = vmatpush1.msra.mxu0 0.0
    %463 = vmatprep.subr.mxu0 0.0
    %464 = vmatpush1.msra.mxu0 0.0
    %465 = vmatprep.subr.mxu0 0.0
    %466 = vmatpush1.msra.mxu0 0.0
    %467 = vmatprep.subr.mxu0 0.0
    %468 = vmatpush1.msra.mxu0 0.0
    %469 = vmatprep.subr.mxu0 0.0
    %470 = vmatpush1.msra.mxu0 0.0
    %471 = vmatprep.subr.mxu0 0.0
    %472 = vmatpush1.msra.mxu0 0.0
    %473 = vmatprep.subr.mxu0 0.0
    %474 = vmatpush1.msra.mxu0 0.0
    %475 = vmatprep.subr.mxu0 0.0
    %476 = vmatpush1.msra.mxu0 0.0
    %477 = vmatprep.subr.mxu0 0.0
    %478 = vmatpush1.msra.mxu0 0.0
    %479 = vmatprep.subr.mxu0 0.0
    %480 = vmatpush1.msra.mxu0 0.0
    %481 = vmatprep.mubr.f32.mxu0 0.0
    %482 = vmatmul.mubr.f32.gmra.mrb[0].mxu0 %v395
    %v483 = vpop.f32.mrb[0].mxu0
    %v484 = vadd.f32 %v416, %v483
    %v485 = vpop.f32.mrb[0].mxu0
    %486 = vdwg.mxu0
    %v487 = vmax.f32 %v484, 0.0
    %s488 = scalar_lea.vmem [#allocation2], 640
    %v489 = vld [vmem:[%s488] sm:$0xff]
    %v490 = vld [vmem:[%s488 + $0x8] sm:$0xff]
    %v491 = vld [vmem:[%s488 + $0x10] sm:$0xff]
    %v492 = vld [vmem:[%s488 + $0x18] sm:$0xff]
    %v493 = vld [vmem:[%s488 + $0x20] sm:$0xff]
    %v494 = vld [vmem:[%s488 + $0x28] sm:$0xff]
    %v495 = vld [vmem:[%s488 + $0x30] sm:$0xff]
    %v496 = vld [vmem:[%s488 + $0x38] sm:$0xff]
    %v497 = vld [vmem:[%s488 + $0x40] sm:$0xff]
    %v498 = vld [vmem:[%s488 + $0x48] sm:$0xff]
    %v499 = vld [vmem:[%s488 + $0x50] sm:$0xff]
    %v500 = vld [vmem:[%s488 + $0x58] sm:$0xff]
    %v501 = vld [vmem:[%s488 + $0x60] sm:$0xff]
    %v502 = vld [vmem:[%s488 + $0x68] sm:$0xff]
    %v503 = vld [vmem:[%s488 + $0x70] sm:$0xff]
    %v504 = vld [vmem:[%s488 + $0x78] sm:$0xff]
    %v505 = vlaneseq
    %v506 = vshrl.u32 %v505, 7
    %v507 = vsub.s32 5, %v506
    %v508 = vrot.slane %v29, %v507
    %509 = vmatprep.subr.mxu0 0.0
    %510 = vmatpush1.msra.mxu0 %v489
    %511 = vmatprep.subr.mxu0 0.0
    %512 = vmatpush1.msra.mxu0 %v490
    %513 = vmatprep.subr.mxu0 0.0
    %514 = vmatpush1.msra.mxu0 %v491
    %515 = vmatprep.subr.mxu0 0.0
    %516 = vmatpush1.msra.mxu0 %v492
    %517 = vmatprep.subr.mxu0 0.0
    %518 = vmatpush1.msra.mxu0 %v493
    %519 = vmatprep.subr.mxu0 0.0
    %520 = vmatpush1.msra.mxu0 %v494
    %521 = vmatprep.subr.mxu0 0.0
    %522 = vmatpush1.msra.mxu0 %v495
    %523 = vmatprep.subr.mxu0 0.0
    %524 = vmatpush1.msra.mxu0 %v496
    %525 = vmatprep.subr.mxu0 0.0
    %526 = vmatpush1.msra.mxu0 %v497
    %527 = vmatprep.subr.mxu0 0.0
    %528 = vmatpush1.msra.mxu0 %v498
    %529 = vmatprep.subr.mxu0 0.0
    %530 = vmatpush1.msra.mxu0 %v499
    %531 = vmatprep.subr.mxu0 0.0
    %532 = vmatpush1.msra.mxu0 %v500
    %533 = vmatprep.subr.mxu0 0.0
    %534 = vmatpush1.msra.mxu0 %v501
    %535 = vmatprep.subr.mxu0 0.0
    %536 = vmatpush1.msra.mxu0 %v502
    %537 = vmatprep.subr.mxu0 0.0
    %538 = vmatpush1.msra.mxu0 %v503
    %539 = vmatprep.subr.mxu0 0.0
    %540 = vmatpush1.msra.mxu0 %v504
    %541 = vmatprep.subr.mxu0 0.0
    %542 = vmatpush1.msra.mxu0 0.0
    %543 = vmatprep.subr.mxu0 0.0
    %544 = vmatpush1.msra.mxu0 0.0
    %545 = vmatprep.subr.mxu0 0.0
    %546 = vmatpush1.msra.mxu0 0.0
    %547 = vmatprep.subr.mxu0 0.0
    %548 = vmatpush1.msra.mxu0 0.0
    %549 = vmatprep.subr.mxu0 0.0
    %550 = vmatpush1.msra.mxu0 0.0
    %551 = vmatprep.subr.mxu0 0.0
    %552 = vmatpush1.msra.mxu0 0.0
    %553 = vmatprep.subr.mxu0 0.0
    %554 = vmatpush1.msra.mxu0 0.0
    %555 = vmatprep.subr.mxu0 0.0
    %556 = vmatpush1.msra.mxu0 0.0
    %557 = vmatprep.subr.mxu0 0.0
    %558 = vmatpush1.msra.mxu0 0.0
    %559 = vmatprep.subr.mxu0 0.0
    %560 = vmatpush1.msra.mxu0 0.0
    %561 = vmatprep.subr.mxu0 0.0
    %562 = vmatpush1.msra.mxu0 0.0
    %563 = vmatprep.subr.mxu0 0.0
    %564 = vmatpush1.msra.mxu0 0.0
    %565 = vmatprep.subr.mxu0 0.0
    %566 = vmatpush1.msra.mxu0 0.0
    %567 = vmatprep.subr.mxu0 0.0
    %568 = vmatpush1.msra.mxu0 0.0
    %569 = vmatprep.subr.mxu0 0.0
    %570 = vmatpush1.msra.mxu0 0.0
    %571 = vmatprep.subr.mxu0 0.0
    %572 = vmatpush1.msra.mxu0 0.0
    %573 = vmatprep.mubr.f32.mxu0 0.0
    %574 = vmatmul.mubr.f32.gmra.mrb[0].mxu0 %v487
    %v575 = vpop.f32.mrb[0].mxu0
    %v576 = vadd.f32 %v508, %v575
    %v577 = vpop.f32.mrb[0].mxu0
    %578 = vdwg.mxu0
    %v579 = vsub.f32 %v576, %v28
    %v580 = vlaneseq
    %v581 = vshrl.u32 %v580, 7
    %v582 = vlaneseq
    %v583 = vand.u32 %v582, 127
    %vm584 = vcmp.lt.s32.totalorder %v581, 2
    %vm585 = vcmp.lt.s32.totalorder %v583, 15
    %vm586 = vmand %vm584, %vm585
    %v587 = vmul.f32 %v579, %v579
    %v588 = vsel %vm586, %v587, 0.0
    %589 = vadd.xlane.f32.xlu0 %v588
    %v590 = vpop.xlane.xlu0 %589
    %vm591 = vcmp.eq.s32.totalorder %v583, 8
    %v592 = vsel %vm591, %v590, %v301
    %593 = vst [vmem:[%s3] sm:$0xff] %v592
    // Predicated region
    $region18: #{linear_net_hamiltonian_forward.1} parent=1 // pred_check
      _
    $region19: #{linear_net_hamiltonian_forward.1} parent=1 // pred_check_branch
      %595 = sbr.rel (0) target = $region21
    $region20: #{linear_net_hamiltonian_forward.1} parent=1 // pred_region
      _
    $region21: #{linear_net_hamiltonian_forward.1} parent=1 // pred_fallthru
      _
    // Predicated region
    $region22: #{linear_net_hamiltonian_forward.1} parent=1 // pred_check
      _
    $region23: #{linear_net_hamiltonian_forward.1} parent=1 // pred_check_branch
      %597 = sbr.rel (0) target = $region25
    $region24: #{linear_net_hamiltonian_forward.1} parent=1 // pred_region
      _
    $region25: #{linear_net_hamiltonian_forward.1} parent=1 // pred_fallthru
      _
    %598 = vsyncpa [#allocation3], 1

</llo_original>
